<compile_context>
chip_gen: v7x
topology: tpu7x:2x2x1
jax: 0.10.0
libtpu: 0.0.40
codegen_flags: <defaults>
</compile_context>

<pallas_src>
import jax
import jax.numpy as jnp
from jax.experimental import pallas as pl
from jax.experimental.pallas import tpu as pltpu

ENC_LAYERS = 16   # `enc_layers` in the PyTorch source
KH = KW = 2       # conv kernel size
PAD = 2           # conv padding
BN_EPS = 1e-5


# ---------------------------------------------------------------- block sizing

def _pick_block_n(n):
    """Images per grid step: largest divisor of n keeping grid length >= 2 (v7x TCs)."""
    for bn in (32, 16, 8, 4, 2):
        if n % bn == 0 and n // bn >= 2:
            return bn
    return 1 if n >= 2 else n


# ---------------------------------------------------------------- Pallas kernel

def _make_kernel(nb, cin, wp, spatial):
    def kernel(x_ref, w_ref, shift_ref, o_ref):
        # x_ref:     [nb, cin, (hp+1)*wp]        flat zero-padded images (VMEM)
        # w_ref:     [KH*KW, ENC_LAYERS, cin]    BN-folded conv weights (VMEM, resident)
        # shift_ref: [ENC_LAYERS, 1]             folded bias/BN shift (VMEM, resident)
        # o_ref:     [nb, ENC_LAYERS, spatial]   lane-dense flat output (row stride wp)

        # hoisted once per grid step (JAX does not CSE broadcast_in_dim)
        base = jnp.broadcast_to(shift_ref[...], (ENC_LAYERS, spatial))
        w_taps = [w_ref[t] for t in range(KH * KW)]          # 4 x [ENC_LAYERS, cin]

        for img in range(nb):
            acc = base
            for kh in range(KH):
                for kw in range(KW):
                    # contiguous flat tap: one lane-dense slice per (kh, kw)
                    taps = x_ref[img, :, pl.ds(kh * wp + kw, spatial)]   # [cin, spatial]
                    acc = acc + jnp.dot(w_taps[kh * KW + kw], taps,
                                        preferred_element_type=jnp.float32)
            # ReLU; Dropout(p=0) is the identity
            o_ref[img] = jnp.maximum(acc, 0.0)

    return kernel


# ---------------------------------------------------------------- forward pass

def cnn_encoder_forward(x, params):
    """x: [N, Cin, H, W] float32  ->  [N, ENC_LAYERS, H+3, W+3] float32 (NCHW)."""
    n, cin, h, w = x.shape
    hp, wp = h + 2 * PAD, w + 2 * PAD
    ho, wo = hp - KH + 1, wp - KW + 1
    spatial = ho * wp          # flat output length per channel (wp-stride rows)

    nb = _pick_block_n(n)
    grid = (n // nb,)

    # host-side, one-time fold of eval-mode BatchNorm + conv bias into the conv weights
    scale = params["bn_gamma"] * jax.lax.rsqrt(params["bn_var"] + BN_EPS)        # [Cout]
    w_folded = (params["conv_w"] * scale[:, None, None, None]).astype(jnp.float32)
    shift = (params["conv_b"] - params["bn_mean"]) * scale + params["bn_beta"]   # [Cout]
    # w_mat[t=kh*KW+kw, co, ci] = w_folded[co, ci, kh, kw]
    w_mat = jnp.transpose(w_folded, (2, 3, 0, 1)).reshape(KH * KW, ENC_LAYERS, cin)
    shift = shift.reshape(ENC_LAYERS, 1).astype(jnp.float32)

    # zero-pad once on the host (+1 extra bottom row so flat taps never read OOB),
    # then flatten the padded spatial dims to one lane-dense axis.
    xpad = jnp.pad(x.astype(jnp.float32),
                   ((0, 0), (0, 0), (PAD, PAD + 1), (PAD, PAD)))          # [N,cin,hp+1,wp]
    xflat = xpad.reshape(n, cin, (hp + 1) * wp)

    out_flat = pl.pallas_call(
        _make_kernel(nb, cin, wp, spatial),
        out_shape=jax.ShapeDtypeStruct((n, ENC_LAYERS, spatial), jnp.float32),
        grid=grid,
        in_specs=[
            pl.BlockSpec((nb, cin, (hp + 1) * wp), lambda i: (i, 0, 0)),
            pl.BlockSpec((KH * KW, ENC_LAYERS, cin), lambda i: (0, 0, 0)),
            pl.BlockSpec((ENC_LAYERS, 1), lambda i: (0, 0)),
        ],
        out_specs=pl.BlockSpec((nb, ENC_LAYERS, spatial), lambda i: (i, 0, 0)),
        compiler_params=pltpu.CompilerParams(
            dimension_semantics=("parallel",),   # v7x: split grid steps across TensorCores
        ),
    )(xflat, w_mat, shift)

    # [N, 16, ho*wp] -> [N, 16, ho, wp] -> drop the one junk column -> [N, 16, ho, wo]
    return out_flat.reshape(n, ENC_LAYERS, ho, wp)[..., :wo]


# ---------------------------------------------------------------- pure-JAX reference

def cnn_encoder_reference(x, params):
    y = jax.lax.conv_general_dilated(
        x, params["conv_w"], window_strides=(1, 1),
        padding=((PAD, PAD), (PAD, PAD)),
        dimension_numbers=("NCHW", "OIHW", "NCHW"),
        precision=jax.lax.Precision.HIGHEST)
    y = y + params["conv_b"].reshape(1, -1, 1, 1)
    scale = params["bn_gamma"] / jnp.sqrt(params["bn_var"] + BN_EPS)
    y = (y - params["bn_mean"].reshape(1, -1, 1, 1)) * scale.reshape(1, -1, 1, 1) \
        + params["bn_beta"].reshape(1, -1, 1, 1)
    return jnp.maximum(y, 0.0)


# ---------------------------------------------------------------- main

if __name__ == "__main__":
    N, Cin, H, W = 2, 4, 16, 16
    Ho = H + 2 * PAD - KH + 1   # 19
    Wo = W + 2 * PAD - KW + 1   # 19

    key = jax.random.PRNGKey(0)
    ks = jax.random.split(key, 7)

    params = {
        # Conv2d(in_channels=4, out=16, k=2): weight [Cout, Cin, KH, KW], bias [Cout]
        "conv_w": 0.1 * jax.random.normal(ks[0], (ENC_LAYERS, Cin, KH, KW), jnp.float32),
        "conv_b": 0.1 * jax.random.normal(ks[1], (ENC_LAYERS,), jnp.float32),
        # BatchNorm2d(16), eval mode (running statistics)
        "bn_gamma": 1.0 + 0.1 * jax.random.normal(ks[2], (ENC_LAYERS,), jnp.float32),
        "bn_beta": 0.1 * jax.random.normal(ks[3], (ENC_LAYERS,), jnp.float32),
        "bn_mean": 0.05 * jax.random.normal(ks[4], (ENC_LAYERS,), jnp.float32),
        "bn_var": jnp.abs(1.0 + 0.1 * jax.random.normal(ks[5], (ENC_LAYERS,), jnp.float32)),
    }

    x = jax.random.normal(ks[6], (N, Cin, H, W), jnp.float32)

    out = jax.block_until_ready(jax.jit(cnn_encoder_forward)(x, params))
    assert out.shape == (N, ENC_LAYERS, Ho, Wo), out.shape

    ref = jax.block_until_ready(cnn_encoder_reference(x, params))
    max_err = float(jnp.max(jnp.abs(out - ref)))
    assert jnp.allclose(out, ref, rtol=1e-3, atol=1e-3), max_err

    print("KERNEL_OK")
</pallas_src>

<mosaic_0001>
module attributes {stable_mosaic.version = 11 : i64} {
  func.func @kernel(%arg0: i32, %arg1: memref<1x4x420xf32, #tpu.memory_space<vmem>>, %arg2: memref<4x16x4xf32, #tpu.memory_space<vmem>>, %arg3: memref<16x1xf32, #tpu.memory_space<vmem>>, %arg4: memref<1x16x380xf32, #tpu.memory_space<vmem>>) attributes {dimension_semantics = [#tpu.dimension_semantics<parallel>], iteration_bounds = array<i64: 2>, scalar_prefetch = 0 : i64, scratch_operands = 0 : i64, tpu.core_type = #tpu.core_type<tc>, window_params = [{transform_indices = @transform_0, window_bounds = array<i64: 1, 4, 420>}, {pipeline_mode = #tpu.pipeline_mode<synchronous>, transform_indices = @transform_1, window_bounds = array<i64: 4, 16, 4>}, {pipeline_mode = #tpu.pipeline_mode<synchronous>, transform_indices = @transform_2, window_bounds = array<i64: 16, 1>}, {transform_indices = @transform_3, window_bounds = array<i64: 1, 16, 380>}]} {
    %c0 = arith.constant 0 : index
    %c0_0 = arith.constant 0 : index
    %0 = vector.load %arg3[%c0, %c0_0] : memref<16x1xf32, #tpu.memory_space<vmem>>, vector<16x1xf32>
    %1 = vector.shape_cast %0 : vector<16x1xf32> to vector<16x1xf32>
    %2 = vector.broadcast %1 : vector<16x1xf32> to vector<16x380xf32>
    %c0_1 = arith.constant 0 : index
    %c0_2 = arith.constant 0 : index
    %c0_3 = arith.constant 0 : index
    %3 = vector.load %arg2[%c0_1, %c0_2, %c0_3] : memref<4x16x4xf32, #tpu.memory_space<vmem>>, vector<1x16x4xf32>
    %4 = vector.shape_cast %3 : vector<1x16x4xf32> to vector<16x4xf32>
    %c1 = arith.constant 1 : index
    %c0_4 = arith.constant 0 : index
    %c0_5 = arith.constant 0 : index
    %5 = vector.load %arg2[%c1, %c0_4, %c0_5] : memref<4x16x4xf32, #tpu.memory_space<vmem>>, vector<1x16x4xf32>
    %6 = vector.shape_cast %5 : vector<1x16x4xf32> to vector<16x4xf32>
    %c2 = arith.constant 2 : index
    %c0_6 = arith.constant 0 : index
    %c0_7 = arith.constant 0 : index
    %7 = vector.load %arg2[%c2, %c0_6, %c0_7] : memref<4x16x4xf32, #tpu.memory_space<vmem>>, vector<1x16x4xf32>
    %8 = vector.shape_cast %7 : vector<1x16x4xf32> to vector<16x4xf32>
    %c3 = arith.constant 3 : index
    %c0_8 = arith.constant 0 : index
    %c0_9 = arith.constant 0 : index
    %9 = vector.load %arg2[%c3, %c0_8, %c0_9] : memref<4x16x4xf32, #tpu.memory_space<vmem>>, vector<1x16x4xf32>
    %10 = vector.shape_cast %9 : vector<1x16x4xf32> to vector<16x4xf32>
    %c0_10 = arith.constant 0 : index
    %c0_11 = arith.constant 0 : index
    %c0_12 = arith.constant 0 : index
    %11 = vector.load %arg1[%c0_10, %c0_11, %c0_12] : memref<1x4x420xf32, #tpu.memory_space<vmem>>, vector<1x4x380xf32>
    %12 = vector.shape_cast %11 : vector<1x4x380xf32> to vector<4x380xf32>
    %cst = arith.constant dense<0.000000e+00> : vector<16x380xf32>
    %13 = tpu.matmul %4, %12, %cst {dimension_numbers = #tpu.dot_dimension_numbers<[1], [0], [0], [1], [0, 0, 1, 1], [], []>} : vector<16x4xf32>, vector<4x380xf32>, vector<16x380xf32> -> vector<16x380xf32>
    %14 = arith.addf %2, %13 : vector<16x380xf32>
    %c0_13 = arith.constant 0 : index
    %c0_14 = arith.constant 0 : index
    %c1_15 = arith.constant 1 : index
    %15 = vector.load %arg1[%c0_13, %c0_14, %c1_15] : memref<1x4x420xf32, #tpu.memory_space<vmem>>, vector<1x4x380xf32>
    %16 = vector.shape_cast %15 : vector<1x4x380xf32> to vector<4x380xf32>
    %cst_16 = arith.constant dense<0.000000e+00> : vector<16x380xf32>
    %17 = tpu.matmul %6, %16, %cst_16 {dimension_numbers = #tpu.dot_dimension_numbers<[1], [0], [0], [1], [0, 0, 1, 1], [], []>} : vector<16x4xf32>, vector<4x380xf32>, vector<16x380xf32> -> vector<16x380xf32>
    %18 = arith.addf %14, %17 : vector<16x380xf32>
    %c0_17 = arith.constant 0 : index
    %c0_18 = arith.constant 0 : index
    %c20 = arith.constant 20 : index
    %19 = vector.load %arg1[%c0_17, %c0_18, %c20] : memref<1x4x420xf32, #tpu.memory_space<vmem>>, vector<1x4x380xf32>
    %20 = vector.shape_cast %19 : vector<1x4x380xf32> to vector<4x380xf32>
    %cst_19 = arith.constant dense<0.000000e+00> : vector<16x380xf32>
    %21 = tpu.matmul %8, %20, %cst_19 {dimension_numbers = #tpu.dot_dimension_numbers<[1], [0], [0], [1], [0, 0, 1, 1], [], []>} : vector<16x4xf32>, vector<4x380xf32>, vector<16x380xf32> -> vector<16x380xf32>
    %22 = arith.addf %18, %21 : vector<16x380xf32>
    %c0_20 = arith.constant 0 : index
    %c0_21 = arith.constant 0 : index
    %c21 = arith.constant 21 : index
    %23 = vector.load %arg1[%c0_20, %c0_21, %c21] : memref<1x4x420xf32, #tpu.memory_space<vmem>>, vector<1x4x380xf32>
    %24 = vector.shape_cast %23 : vector<1x4x380xf32> to vector<4x380xf32>
    %cst_22 = arith.constant dense<0.000000e+00> : vector<16x380xf32>
    %25 = tpu.matmul %10, %24, %cst_22 {dimension_numbers = #tpu.dot_dimension_numbers<[1], [0], [0], [1], [0, 0, 1, 1], [], []>} : vector<16x4xf32>, vector<4x380xf32>, vector<16x380xf32> -> vector<16x380xf32>
    %26 = arith.addf %22, %25 : vector<16x380xf32>
    %cst_23 = arith.constant 0.000000e+00 : f32
    %27 = vector.broadcast %cst_23 : f32 to vector<16x380xf32>
    %28 = arith.maximumf %26, %27 : vector<16x380xf32>
    %c0_24 = arith.constant 0 : index
    %c0_25 = arith.constant 0 : index
    %c0_26 = arith.constant 0 : index
    %29 = vector.load %arg4[%c0_24, %c0_25, %c0_26] : memref<1x16x380xf32, #tpu.memory_space<vmem>>, vector<1x16x380xf32>
    %30 = vector.shape_cast %29 : vector<1x16x380xf32> to vector<16x380xf32>
    %31 = vector.shape_cast %28 : vector<16x380xf32> to vector<1x16x380xf32>
    tpu.vector_store %arg4[%c0_24, %c0_25, %c0_26], %31 {strides = array<i32>} : memref<1x16x380xf32, #tpu.memory_space<vmem>>, vector<1x16x380xf32>,
    return
  }
  func.func @transform_0(%arg0: i32) -> (i32, i32, i32) {
    %c0_i32 = arith.constant 0 : i32
    %c0_i32_0 = arith.constant 0 : i32
    %c0_i32_1 = arith.constant 0 : i32
    return %arg0, %c0_i32, %c0_i32_0 : i32, i32, i32
  }
  func.func @transform_1(%arg0: i32) -> (i32, i32, i32) {
    %c0_i32 = arith.constant 0 : i32
    %c0_i32_0 = arith.constant 0 : i32
    %c0_i32_1 = arith.constant 0 : i32
    %c0_i32_2 = arith.constant 0 : i32
    return %c0_i32, %c0_i32_0, %c0_i32_1 : i32, i32, i32
  }
  func.func @transform_2(%arg0: i32) -> (i32, i32) {
    %c0_i32 = arith.constant 0 : i32
    %c0_i32_0 = arith.constant 0 : i32
    %c0_i32_1 = arith.constant 0 : i32
    return %c0_i32, %c0_i32_0 : i32, i32
  }
  func.func @transform_3(%arg0: i32) -> (i32, i32, i32) {
    %c0_i32 = arith.constant 0 : i32
    %c0_i32_0 = arith.constant 0 : i32
    %c0_i32_1 = arith.constant 0 : i32
    return %arg0, %c0_i32, %c0_i32_0 : i32, i32, i32
  }
}

</mosaic_0001>

<llo_original>
// kernel: cnn_encoder_forward.1
$region0: #{cnn_encoder_forward.1}
  #allocation0 [shape = 'u32[]', space=smem, size = 0x4, offset = 0x4, fixed_abs, tag = 'smem constant byte address 0x4 - core index']
  #allocation1 [shape = 'u32[144,128]{1,0:T(1,128)}', space=vmem, size = 0x12000, scoped, tag = 'internal scratch']
  %s0 = inlined_call_operand.vmem [shape: f32[2,4,420], index: 0, kind: input, shape index: {}]
  %s1 = inlined_call_operand.vmem [shape: f32[4,16,4], index: 1, kind: input, shape index: {}]
  %s2 = inlined_call_operand.vmem [shape: f32[16,1], index: 2, kind: input, shape index: {}]
  %s3 = inlined_call_operand.vmem [shape: f32[2,16,380], index: 3, kind: output, shape index: {}]
  %s4 = sld [smem:[#allocation0]]
  $region45: #{cnn_encoder_forward.1} parent=0
    _
  %s6 = ssub.s32 1, %s4
  %s7 = scalar_select 0, %s6, %s4
  loop: start=0, step=1, limit=4
  $region2: #{cnn_encoder_forward.1} parent=0 // loop_pre_header
    _
  $region3: #{cnn_encoder_forward.1} parent=0 // loop_header
    %s9 = sphi 0, %s13
    %p10 = scmp.ge.s32.totalorder %s9, 4
    %s19 = sphi 0, %s21
    %s22 = sphi 0, %s19
    %s23 = sphi 0, %s22
    %s39 = sphi 0, %s23
    %s43 = sphi 0, %s43
    %s45 = sphi 0, %s43
    %s46 = sphi 0, %s45
    %s60 = sphi 0, %s46
    %s64 = sphi 0, %s64
    %s66 = sphi 0, %s64
    %s67 = sphi 0, %s66
    %s81 = sphi 0, %s67
    %s87 = sphi 0, %s89
    %s90 = sphi 0, %s87
    %s91 = sphi 0, %s90
    %s107 = sphi 0, %s91
  $region4: #{cnn_encoder_forward.1} parent=0 // loop_header_branch
    %12 = sbr.rel (%p10) target = $region8
  $region5: #{cnn_encoder_forward.1} parent=0 // loop_body
    %s14 = ssub.s32 %s9, 1
    %s15 = ssub.s32 %s9, 2
    %s16 = sadd.s32 %s9, 1
    %s17 = ssub.s32 %s9, %s16
    %p18 = scmp.eq.s32.totalorder %s17, 0
    %s20 = sadd.s32 %s19, 1
    %s21 = scalar_select %p18, %s19, %s20
    %p24 = pneg %p18
    %p25 = scmp.eq.s32.totalorder %s9, 1
    %p26 = por %p24, %p25
    %p27 = scmp.ne.s32.totalorder %s19, %s22
    %p28 = scmp.eq.s32.totalorder %s9, 0
    %p29 = por %p27, %p28
    %p30 = scmp.ne.s32.totalorder %s19, %s22
    %p31 = scmp.eq.s32.totalorder %s14, 1
    %p32 = por %p30, %p31
    %p33 = scmp.ne.s32.totalorder %s22, %s23
    %p34 = scmp.eq.s32.totalorder %s14, 0
    %p35 = por %p33, %p34
    %p36 = scmp.ne.s32.totalorder %s22, %s23
    %p37 = scmp.eq.s32.totalorder %s15, 1
    %p38 = por %p36, %p37
    %p40 = scmp.ne.s32.totalorder %s23, %s39
    %p41 = scmp.eq.s32.totalorder %s15, 0
    %p42 = por %p40, %p41
    %s44 = sadd.s32 %s43, 1
    %p47 = scmp.eq.s32.totalorder %s9, 1
    %p48 = scmp.ne.s32.totalorder %s43, %s45
    %p49 = scmp.eq.s32.totalorder %s9, 0
    %p50 = por %p48, %p49
    %p51 = scmp.ne.s32.totalorder %s43, %s45
    %p52 = scmp.eq.s32.totalorder %s14, 1
    %p53 = por %p51, %p52
    %p54 = scmp.ne.s32.totalorder %s45, %s46
    %p55 = scmp.eq.s32.totalorder %s14, 0
    %p56 = por %p54, %p55
    %p57 = scmp.ne.s32.totalorder %s45, %s46
    %p58 = scmp.eq.s32.totalorder %s15, 1
    %p59 = por %p57, %p58
    %p61 = scmp.ne.s32.totalorder %s46, %s60
    %p62 = scmp.eq.s32.totalorder %s15, 0
    %p63 = por %p61, %p62
    %s65 = sadd.s32 %s64, 1
    %p68 = scmp.eq.s32.totalorder %s9, 1
    %p69 = scmp.ne.s32.totalorder %s64, %s66
    %p70 = scmp.eq.s32.totalorder %s9, 0
    %p71 = por %p69, %p70
    %p72 = scmp.ne.s32.totalorder %s64, %s66
    %p73 = scmp.eq.s32.totalorder %s14, 1
    %p74 = por %p72, %p73
    %p75 = scmp.ne.s32.totalorder %s66, %s67
    %p76 = scmp.eq.s32.totalorder %s14, 0
    %p77 = por %p75, %p76
    %p78 = scmp.ne.s32.totalorder %s66, %s67
    %p79 = scmp.eq.s32.totalorder %s15, 1
    %p80 = por %p78, %p79
    %p82 = scmp.ne.s32.totalorder %s67, %s81
    %p83 = scmp.eq.s32.totalorder %s15, 0
    %p84 = por %p82, %p83
    %s85 = ssub.s32 %s9, %s16
    %p86 = scmp.eq.s32.totalorder %s85, 0
    %s88 = sadd.s32 %s87, 1
    %s89 = scalar_select %p86, %s87, %s88
    %p92 = pneg %p86
    %p93 = scmp.eq.s32.totalorder %s9, 1
    %p94 = por %p92, %p93
    %p95 = scmp.ne.s32.totalorder %s87, %s90
    %p96 = scmp.eq.s32.totalorder %s9, 0
    %p97 = por %p95, %p96
    %p98 = scmp.ne.s32.totalorder %s87, %s90
    %p99 = scmp.eq.s32.totalorder %s14, 1
    %p100 = por %p98, %p99
    %p101 = scmp.ne.s32.totalorder %s90, %s91
    %p102 = scmp.eq.s32.totalorder %s14, 0
    %p103 = por %p101, %p102
    %p104 = scmp.ne.s32.totalorder %s90, %s91
    %p105 = scmp.eq.s32.totalorder %s15, 1
    %p106 = por %p104, %p105
    %p108 = scmp.ne.s32.totalorder %s91, %s107
    %p109 = scmp.eq.s32.totalorder %s15, 0
    %p110 = por %p108, %p109
    %p111 = scmp.le.s32.totalorder 1, %s9
    %p112 = scmp.lt.s32.totalorder %s9, 3
    %p113 = pnand %p111, %p112
    %p114 = pneg %p113
    // Predicated region
    $region9: #{cnn_encoder_forward.1} parent=5 // pred_check
      _
    $region10: #{cnn_encoder_forward.1} parent=5 // pred_check_branch
      %116 = sbr.rel (%p113) target = $region12
    $region11: #{cnn_encoder_forward.1} parent=5 // pred_region
      %s117 = ssub.s32 %s9, 1
      // Predicated region
      $region13: #{cnn_encoder_forward.1} parent=11 // pred_check
        %p118 = pneg %p56
      $region14: #{cnn_encoder_forward.1} parent=11 // pred_check_branch
        %120 = sbr.rel (%p118) target = $region16
      $region15: #{cnn_encoder_forward.1} parent=11 // pred_region
        _
      $region16: #{cnn_encoder_forward.1} parent=11 // pred_fallthru
        _
      // Predicated region
      $region17: #{cnn_encoder_forward.1} parent=11 // pred_check
        %p121 = pneg %p77
      $region18: #{cnn_encoder_forward.1} parent=11 // pred_check_branch
        %123 = sbr.rel (%p121) target = $region20
      $region19: #{cnn_encoder_forward.1} parent=11 // pred_region
        _
      $region20: #{cnn_encoder_forward.1} parent=11 // pred_fallthru
        _
    $region12: #{cnn_encoder_forward.1} parent=5 // pred_fallthru
      _
    %p124 = scmp.lt.s32.totalorder %s9, 2
    // Predicated region
    $region21: #{cnn_encoder_forward.1} parent=5 // pred_check
      %p125 = pneg %p124
    $region22: #{cnn_encoder_forward.1} parent=5 // pred_check_branch
      %127 = sbr.rel (%p125) target = $region24
    $region23: #{cnn_encoder_forward.1} parent=5 // pred_region
      // Predicated region
      $region25: #{cnn_encoder_forward.1} parent=23 // pred_check
        %p128 = pneg %p29
      $region26: #{cnn_encoder_forward.1} parent=23 // pred_check_branch
        %130 = sbr.rel (%p128) target = $region28
      $region27: #{cnn_encoder_forward.1} parent=23 // pred_region
        %p131 = scmp.lt.s32.totalorder %s9, 1
        %s132 = scalar_select %p131, %s9, 1
        %s133 = smul.addr %s132, 4
        %s134 = smul.addr %s133, 4
        %s135 = scalar_lea.vmem %s0, %s134
      $region28: #{cnn_encoder_forward.1} parent=23 // pred_fallthru
        _
    $region24: #{cnn_encoder_forward.1} parent=5 // pred_fallthru
      _
    %p136 = scmp.le.s32.totalorder 1, %s9
    %p137 = scmp.lt.s32.totalorder %s9, 3
    %p138 = pnand %p136, %p137
    %p139 = pneg %p138
    // Predicated region
    $region29: #{cnn_encoder_forward.1} parent=5 // pred_check
      _
    $region30: #{cnn_encoder_forward.1} parent=5 // pred_check_branch
      %141 = sbr.rel (%p138) target = $region32
    $region31: #{cnn_encoder_forward.1} parent=5 // pred_region
      %s142 = ssub.s32 %s9, 1
      %p143 = scmp.lt.s32.totalorder %s14, 1
      %s144 = scalar_select %p143, %s14, 1
      %s145 = smul.addr %s144, 4
      %s146 = smul.addr %s145, 4
      %s147 = scalar_lea.vmem %s0, %s146
      %p148 = pneg %p35
      %p149 = pneg %p32
      %p150 = pneg %p56
      %p151 = pneg %p53
      %p152 = pneg %p77
      %p153 = pneg %p74
      %p154 = pneg %p103
      %p155 = pneg %p100
      %p156 = scmp.lt.s32.totalorder %s14, 1
      %s157 = scalar_select %p156, %s14, 1
      %s158 = smul.addr %s157, 6
      %s159 = smul.addr %s158, 8
      %s160 = scalar_lea.vmem %s3, %s159
      %p161 = scmp.lt.s32.totalorder %s14, 1
      %s162 = scalar_select %p161, %s14, 1
      %s163 = smul.addr %s162, 4
      %s164 = smul.addr %s163, 4
      %s165 = scalar_lea.vmem %s0, %s164
      %p166 = scmp.lt.s32.totalorder %s14, 1
      %s167 = scalar_select %p166, %s14, 1
      %s168 = smul.addr %s167, 6
      %s169 = smul.addr %s168, 8
      %s170 = scalar_lea.vmem %s3, %s169
      %v171 = vld [vmem:[%s2] sm:$0xff]
      %v172 = vld [vmem:[%s2 + $0x8] sm:$0xff]
      %174 = vset.pattern.permute.xlu0 0
      %175 = vperm.xlu0 %174, %v171
      %v176 = vpop.permute.xlu0 %175
      %179 = vset.pattern.permute.xlu0 0
      %180 = vperm.xlu0 %179, %v172
      %v181 = vpop.permute.xlu0 %180
      %v183 = vld [vmem:[%s1] sm:$0xff]
      %v184 = vld [vmem:[%s1 + $0x8] sm:$0xff]
      %s185 = scalar_lea.vmem %s1, 16
      %v186 = vld [vmem:[%s185] sm:$0xff]
      %v187 = vld [vmem:[%s185 + $0x8] sm:$0xff]
      %s188 = scalar_lea.vmem %s1, 32
      %v189 = vld [vmem:[%s188] sm:$0xff]
      %v190 = vld [vmem:[%s188 + $0x8] sm:$0xff]
      %s191 = scalar_lea.vmem %s1, 48
      %v192 = vld [vmem:[%s191] sm:$0xff]
      %v193 = vld [vmem:[%s191 + $0x8] sm:$0xff]
      %v194 = vld [vmem:[%s165] sm:$0xff]
      %v195 = vld [vmem:[%s165 + $0x8] sm:$0xf]
      %v198 = vcombine.high %v194, %v194
      %vm199 = vcmask 31744
      %v201 = vsel %vm199, %v183, 0
      %v204 = vsel %vm199, %v184, 0
      %vm206 = vcmask 1043456
      %v207 = vsel %vm206, %v194, 0
      %v209 = vsel %vm206, %v198, 0
      %v211 = vsel %vm206, %v195, 0
      %213 = vmatprep.subr.mxu0 %v209
      %214 = vmatpush1.msra.mxu0 %v207
      %215 = vmatprep.subr.mxu0 0.0
      %216 = vmatpush1.msra.mxu0 0.0
      %217 = vmatprep.subr.mxu0 0.0
      %218 = vmatpush1.msra.mxu0 0.0
      %219 = vmatprep.subr.mxu0 0.0
      %220 = vmatpush1.msra.mxu0 0.0
      %221 = vmatprep.subr.mxu0 0.0
      %222 = vmatpush1.msra.mxu0 0.0
      %223 = vmatprep.subr.mxu0 0.0
      %224 = vmatpush1.msra.mxu0 0.0
      %225 = vmatprep.subr.mxu0 0.0
      %226 = vmatpush1.msra.mxu0 0.0
      %227 = vmatprep.subr.mxu0 0.0
      %228 = vmatpush1.msra.mxu0 0.0
      %229 = vmatprep.subr.mxu0 0.0
      %230 = vmatpush1.msra.mxu0 0.0
      %231 = vmatprep.subr.mxu0 0.0
      %232 = vmatpush1.msra.mxu0 0.0
      %233 = vmatprep.subr.mxu0 0.0
      %234 = vmatpush1.msra.mxu0 0.0
      %235 = vmatprep.subr.mxu0 0.0
      %236 = vmatpush1.msra.mxu0 0.0
      %237 = vmatprep.subr.mxu0 0.0
      %238 = vmatpush1.msra.mxu0 0.0
      %239 = vmatprep.subr.mxu0 0.0
      %240 = vmatpush1.msra.mxu0 0.0
      %241 = vmatprep.subr.mxu0 0.0
      %242 = vmatpush1.msra.mxu0 0.0
      %243 = vmatprep.subr.mxu0 0.0
      %244 = vmatpush1.msra.mxu0 0.0
      %245 = vmatprep.subr.mxu0 0.0
      %246 = vmatpush1.msra.mxu0 0.0
      %247 = vmatprep.subr.mxu0 0.0
      %248 = vmatpush1.msra.mxu0 0.0
      %249 = vmatprep.subr.mxu0 0.0
      %250 = vmatpush1.msra.mxu0 0.0
      %251 = vmatprep.subr.mxu0 0.0
      %252 = vmatpush1.msra.mxu0 0.0
      %253 = vmatprep.subr.mxu0 0.0
      %254 = vmatpush1.msra.mxu0 0.0
      %255 = vmatprep.subr.mxu0 0.0
      %256 = vmatpush1.msra.mxu0 0.0
      %257 = vmatprep.subr.mxu0 0.0
      %258 = vmatpush1.msra.mxu0 0.0
      %259 = vmatprep.subr.mxu0 0.0
      %260 = vmatpush1.msra.mxu0 0.0
      %261 = vmatprep.subr.mxu0 0.0
      %262 = vmatpush1.msra.mxu0 0.0
      %263 = vmatprep.subr.mxu0 0.0
      %264 = vmatpush1.msra.mxu0 0.0
      %265 = vmatprep.subr.mxu0 0.0
      %266 = vmatpush1.msra.mxu0 0.0
      %267 = vmatprep.subr.mxu0 0.0
      %268 = vmatpush1.msra.mxu0 0.0
      %269 = vmatprep.subr.mxu0 0.0
      %270 = vmatpush1.msra.mxu0 0.0
      %271 = vmatprep.subr.mxu0 0.0
      %272 = vmatpush1.msra.mxu0 0.0
      %273 = vmatprep.subr.mxu0 0.0
      %274 = vmatpush1.msra.mxu0 0.0
      %275 = vmatprep.subr.mxu0 0.0
      %276 = vmatpush1.msra.mxu0 0.0
      %277 = vmatprep.mubr.f32.mxu0 0.0
      %278 = vmatmul.mubr.f32.gmra.mrb[0].mxu0 %v201
      %v279 = vpop.f32.mrb[0].mxu0
      %v280 = vadd.f32 0.0, %v279
      %v281 = vpop.f32.mrb[0].mxu0
      %v282 = vadd.f32 0.0, %v281
      %283 = vmatprep.mubr.f32.mxu0 0.0
      %284 = vmatmul.mubr.f32.gmra.mrb[0].mxu0 %v204
      %v285 = vpop.f32.mrb[0].mxu0
      %v286 = vadd.f32 0.0, %v285
      %v287 = vpop.f32.mrb[0].mxu0
      %v288 = vadd.f32 0.0, %v287
      %289 = vdwg.mxu0
      %290 = vmatprep.subr.mxu0 0.0
      %291 = vmatpush1.msra.mxu0 %v211
      %292 = vmatprep.subr.mxu0 0.0
      %293 = vmatpush1.msra.mxu0 0.0
      %294 = vmatprep.subr.mxu0 0.0
      %295 = vmatpush1.msra.mxu0 0.0
      %296 = vmatprep.subr.mxu0 0.0
      %297 = vmatpush1.msra.mxu0 0.0
      %298 = vmatprep.subr.mxu0 0.0
      %299 = vmatpush1.msra.mxu0 0.0
      %300 = vmatprep.subr.mxu0 0.0
      %301 = vmatpush1.msra.mxu0 0.0
      %302 = vmatprep.subr.mxu0 0.0
      %303 = vmatpush1.msra.mxu0 0.0
      %304 = vmatprep.subr.mxu0 0.0
      %305 = vmatpush1.msra.mxu0 0.0
      %306 = vmatprep.subr.mxu0 0.0
      %307 = vmatpush1.msra.mxu0 0.0
      %308 = vmatprep.subr.mxu0 0.0
      %309 = vmatpush1.msra.mxu0 0.0
      %310 = vmatprep.subr.mxu0 0.0
      %311 = vmatpush1.msra.mxu0 0.0
      %312 = vmatprep.subr.mxu0 0.0
      %313 = vmatpush1.msra.mxu0 0.0
      %314 = vmatprep.subr.mxu0 0.0
      %315 = vmatpush1.msra.mxu0 0.0
      %316 = vmatprep.subr.mxu0 0.0
      %317 = vmatpush1.msra.mxu0 0.0
      %318 = vmatprep.subr.mxu0 0.0
      %319 = vmatpush1.msra.mxu0 0.0
      %320 = vmatprep.subr.mxu0 0.0
      %321 = vmatpush1.msra.mxu0 0.0
      %322 = vmatprep.subr.mxu0 0.0
      %323 = vmatpush1.msra.mxu0 0.0
      %324 = vmatprep.subr.mxu0 0.0
      %325 = vmatpush1.msra.mxu0 0.0
      %326 = vmatprep.subr.mxu0 0.0
      %327 = vmatpush1.msra.mxu0 0.0
      %328 = vmatprep.subr.mxu0 0.0
      %329 = vmatpush1.msra.mxu0 0.0
      %330 = vmatprep.subr.mxu0 0.0
      %331 = vmatpush1.msra.mxu0 0.0
      %332 = vmatprep.subr.mxu0 0.0
      %333 = vmatpush1.msra.mxu0 0.0
      %334 = vmatprep.subr.mxu0 0.0
      %335 = vmatpush1.msra.mxu0 0.0
      %336 = vmatprep.subr.mxu0 0.0
      %337 = vmatpush1.msra.mxu0 0.0
      %338 = vmatprep.subr.mxu0 0.0
      %339 = vmatpush1.msra.mxu0 0.0
      %340 = vmatprep.subr.mxu0 0.0
      %341 = vmatpush1.msra.mxu0 0.0
      %342 = vmatprep.subr.mxu0 0.0
      %343 = vmatpush1.msra.mxu0 0.0
      %344 = vmatprep.subr.mxu0 0.0
      %345 = vmatpush1.msra.mxu0 0.0
      %346 = vmatprep.subr.mxu0 0.0
      %347 = vmatpush1.msra.mxu0 0.0
      %348 = vmatprep.subr.mxu0 0.0
      %349 = vmatpush1.msra.mxu0 0.0
      %350 = vmatprep.subr.mxu0 0.0
      %351 = vmatpush1.msra.mxu0 0.0
      %352 = vmatprep.subr.mxu0 0.0
      %353 = vmatpush1.msra.mxu0 0.0
      %354 = vmatprep.mubr.f32.mxu0 0.0
      %355 = vmatmul.mubr.f32.gmra.mrb[0].mxu0 %v201
      %v356 = vpop.f32.mrb[0].mxu0
      %v357 = vadd.f32 0.0, %v356
      %v358 = vpop.f32.mrb[0].mxu0
      %359 = vmatprep.mubr.f32.mxu0 0.0
      %360 = vmatmul.mubr.f32.gmra.mrb[0].mxu0 %v204
      %v361 = vpop.f32.mrb[0].mxu0
      %v362 = vadd.f32 0.0, %v361
      %v363 = vpop.f32.mrb[0].mxu0
      %364 = vdwg.mxu0
      %v365 = vadd.f32 %v176, %v280
      %v366 = vadd.f32 %v176, %v282
      %v367 = vadd.f32 %v176, %v357
      %v368 = vadd.f32 %v181, %v286
      %v369 = vadd.f32 %v181, %v288
      %v370 = vadd.f32 %v181, %v362
      %v371 = vld [vmem:[%s165] sm:$0xff]
      %v372 = vld [vmem:[%s165 + $0x8] sm:$0xf]
      %v375 = vcombine.high %v371, %v371
      %376 = vrot.lane.b32.xlu0 %v371, 127
      %v377 = vpop.permute.xlu0 %376
      %378 = vrot.lane.b32.xlu0 %v375, 127
      %v379 = vpop.permute.xlu0 %378
      %380 = vrot.lane.b32.xlu0 %v372, 127
      %v381 = vpop.permute.xlu0 %380
      %vm382 = vcmask 1039360
      %v383 = vsel %vm382, %v377, %v379
      %v384 = vsel %vm382, %v379, %v381
      %v386 = vsel %vm199, %v186, 0
      %v389 = vsel %vm199, %v187, 0
      %v391 = vsel %vm206, %v383, 0
      %v393 = vsel %vm206, %v384, 0
      %v395 = vsel %vm206, %v381, 0
      %397 = vmatprep.subr.mxu0 %v393
      %398 = vmatpush1.msra.mxu0 %v391
      %399 = vmatprep.subr.mxu0 0.0
      %400 = vmatpush1.msra.mxu0 0.0
      %401 = vmatprep.subr.mxu0 0.0
      %402 = vmatpush1.msra.mxu0 0.0
      %403 = vmatprep.subr.mxu0 0.0
      %404 = vmatpush1.msra.mxu0 0.0
      %405 = vmatprep.subr.mxu0 0.0
      %406 = vmatpush1.msra.mxu0 0.0
      %407 = vmatprep.subr.mxu0 0.0
      %408 = vmatpush1.msra.mxu0 0.0
      %409 = vmatprep.subr.mxu0 0.0
      %410 = vmatpush1.msra.mxu0 0.0
      %411 = vmatprep.subr.mxu0 0.0
      %412 = vmatpush1.msra.mxu0 0.0
      %413 = vmatprep.subr.mxu0 0.0
      %414 = vmatpush1.msra.mxu0 0.0
      %415 = vmatprep.subr.mxu0 0.0
      %416 = vmatpush1.msra.mxu0 0.0
      %417 = vmatprep.subr.mxu0 0.0
      %418 = vmatpush1.msra.mxu0 0.0
      %419 = vmatprep.subr.mxu0 0.0
      %420 = vmatpush1.msra.mxu0 0.0
      %421 = vmatprep.subr.mxu0 0.0
      %422 = vmatpush1.msra.mxu0 0.0
      %423 = vmatprep.subr.mxu0 0.0
      %424 = vmatpush1.msra.mxu0 0.0
      %425 = vmatprep.subr.mxu0 0.0
      %426 = vmatpush1.msra.mxu0 0.0
      %427 = vmatprep.subr.mxu0 0.0
      %428 = vmatpush1.msra.mxu0 0.0
      %429 = vmatprep.subr.mxu0 0.0
      %430 = vmatpush1.msra.mxu0 0.0
      %431 = vmatprep.subr.mxu0 0.0
      %432 = vmatpush1.msra.mxu0 0.0
      %433 = vmatprep.subr.mxu0 0.0
      %434 = vmatpush1.msra.mxu0 0.0
      %435 = vmatprep.subr.mxu0 0.0
      %436 = vmatpush1.msra.mxu0 0.0
      %437 = vmatprep.subr.mxu0 0.0
      %438 = vmatpush1.msra.mxu0 0.0
      %439 = vmatprep.subr.mxu0 0.0
      %440 = vmatpush1.msra.mxu0 0.0
      %441 = vmatprep.subr.mxu0 0.0
      %442 = vmatpush1.msra.mxu0 0.0
      %443 = vmatprep.subr.mxu0 0.0
      %444 = vmatpush1.msra.mxu0 0.0
      %445 = vmatprep.subr.mxu0 0.0
      %446 = vmatpush1.msra.mxu0 0.0
      %447 = vmatprep.subr.mxu0 0.0
      %448 = vmatpush1.msra.mxu0 0.0
      %449 = vmatprep.subr.mxu0 0.0
      %450 = vmatpush1.msra.mxu0 0.0
      %451 = vmatprep.subr.mxu0 0.0
      %452 = vmatpush1.msra.mxu0 0.0
      %453 = vmatprep.subr.mxu0 0.0
      %454 = vmatpush1.msra.mxu0 0.0
      %455 = vmatprep.subr.mxu0 0.0
      %456 = vmatpush1.msra.mxu0 0.0
      %457 = vmatprep.subr.mxu0 0.0
      %458 = vmatpush1.msra.mxu0 0.0
      %459 = vmatprep.subr.mxu0 0.0
      %460 = vmatpush1.msra.mxu0 0.0
      %461 = vmatprep.mubr.f32.mxu0 0.0
      %462 = vmatmul.mubr.f32.gmra.mrb[0].mxu0 %v386
      %v463 = vpop.f32.mrb[0].mxu0
      %v464 = vadd.f32 0.0, %v463
      %v465 = vpop.f32.mrb[0].mxu0
      %v466 = vadd.f32 0.0, %v465
      %467 = vmatprep.mubr.f32.mxu0 0.0
      %468 = vmatmul.mubr.f32.gmra.mrb[0].mxu0 %v389
      %v469 = vpop.f32.mrb[0].mxu0
      %v470 = vadd.f32 0.0, %v469
      %v471 = vpop.f32.mrb[0].mxu0
      %v472 = vadd.f32 0.0, %v471
      %473 = vdwg.mxu0
      %474 = vmatprep.subr.mxu0 0.0
      %475 = vmatpush1.msra.mxu0 %v395
      %476 = vmatprep.subr.mxu0 0.0
      %477 = vmatpush1.msra.mxu0 0.0
      %478 = vmatprep.subr.mxu0 0.0
      %479 = vmatpush1.msra.mxu0 0.0
      %480 = vmatprep.subr.mxu0 0.0
      %481 = vmatpush1.msra.mxu0 0.0
      %482 = vmatprep.subr.mxu0 0.0
      %483 = vmatpush1.msra.mxu0 0.0
      %484 = vmatprep.subr.mxu0 0.0
      %485 = vmatpush1.msra.mxu0 0.0
      %486 = vmatprep.subr.mxu0 0.0
      %487 = vmatpush1.msra.mxu0 0.0
      %488 = vmatprep.subr.mxu0 0.0
      %489 = vmatpush1.msra.mxu0 0.0
      %490 = vmatprep.subr.mxu0 0.0
      %491 = vmatpush1.msra.mxu0 0.0
      %492 = vmatprep.subr.mxu0 0.0
      %493 = vmatpush1.msra.mxu0 0.0
      %494 = vmatprep.subr.mxu0 0.0
      %495 = vmatpush1.msra.mxu0 0.0
      %496 = vmatprep.subr.mxu0 0.0
      %497 = vmatpush1.msra.mxu0 0.0
      %498 = vmatprep.subr.mxu0 0.0
      %499 = vmatpush1.msra.mxu0 0.0
      %500 = vmatprep.subr.mxu0 0.0
      %501 = vmatpush1.msra.mxu0 0.0
      %502 = vmatprep.subr.mxu0 0.0
      %503 = vmatpush1.msra.mxu0 0.0
      %504 = vmatprep.subr.mxu0 0.0
      %505 = vmatpush1.msra.mxu0 0.0
      %506 = vmatprep.subr.mxu0 0.0
      %507 = vmatpush1.msra.mxu0 0.0
      %508 = vmatprep.subr.mxu0 0.0
      %509 = vmatpush1.msra.mxu0 0.0
      %510 = vmatprep.subr.mxu0 0.0
      %511 = vmatpush1.msra.mxu0 0.0
      %512 = vmatprep.subr.mxu0 0.0
      %513 = vmatpush1.msra.mxu0 0.0
      %514 = vmatprep.subr.mxu0 0.0
      %515 = vmatpush1.msra.mxu0 0.0
      %516 = vmatprep.subr.mxu0 0.0
      %517 = vmatpush1.msra.mxu0 0.0
      %518 = vmatprep.subr.mxu0 0.0
      %519 = vmatpush1.msra.mxu0 0.0
      %520 = vmatprep.subr.mxu0 0.0
      %521 = vmatpush1.msra.mxu0 0.0
      %522 = vmatprep.subr.mxu0 0.0
      %523 = vmatpush1.msra.mxu0 0.0
      %524 = vmatprep.subr.mxu0 0.0
      %525 = vmatpush1.msra.mxu0 0.0
      %526 = vmatprep.subr.mxu0 0.0
      %527 = vmatpush1.msra.mxu0 0.0
      %528 = vmatprep.subr.mxu0 0.0
      %529 = vmatpush1.msra.mxu0 0.0
      %530 = vmatprep.subr.mxu0 0.0
      %531 = vmatpush1.msra.mxu0 0.0
      %532 = vmatprep.subr.mxu0 0.0
      %533 = vmatpush1.msra.mxu0 0.0
      %534 = vmatprep.subr.mxu0 0.0
      %535 = vmatpush1.msra.mxu0 0.0
      %536 = vmatprep.subr.mxu0 0.0
      %537 = vmatpush1.msra.mxu0 0.0
      %538 = vmatprep.mubr.f32.mxu0 0.0
      %539 = vmatmul.mubr.f32.gmra.mrb[0].mxu0 %v386
      %v540 = vpop.f32.mrb[0].mxu0
      %v541 = vadd.f32 0.0, %v540
      %v542 = vpop.f32.mrb[0].mxu0
      %543 = vmatprep.mubr.f32.mxu0 0.0
      %544 = vmatmul.mubr.f32.gmra.mrb[0].mxu0 %v389
      %v545 = vpop.f32.mrb[0].mxu0
      %v546 = vadd.f32 0.0, %v545
      %v547 = vpop.f32.mrb[0].mxu0
      %548 = vdwg.mxu0
      %v549 = vadd.f32 %v365, %v464
      %v550 = vadd.f32 %v366, %v466
      %v551 = vadd.f32 %v367, %v541
      %v552 = vadd.f32 %v368, %v470
      %v553 = vadd.f32 %v369, %v472
      %v554 = vadd.f32 %v370, %v546
      %v555 = vld [vmem:[%s165] sm:$0xff]
      %v556 = vld [vmem:[%s165 + $0x8] sm:$0xff]
      %v559 = vcombine.high %v555, %v555
      %v560 = vcombine.high %v556, %v556
      %561 = vrot.lane.b32.xlu0 %v555, 108
      %v562 = vpop.permute.xlu0 %561
      %563 = vrot.lane.b32.xlu0 %v559, 108
      %v564 = vpop.permute.xlu0 %563
      %565 = vrot.lane.b32.xlu0 %v556, 108
      %v566 = vpop.permute.xlu0 %565
      %567 = vrot.lane.b32.xlu0 %v560, 108
      %v568 = vpop.permute.xlu0 %567
      %vm569 = vcmask 883712
      %v570 = vsel %vm569, %v562, %v564
      %v571 = vsel %vm569, %v564, %v566
      %v572 = vsel %vm569, %v566, %v568
      %v574 = vsel %vm199, %v189, 0
      %v577 = vsel %vm199, %v190, 0
      %v579 = vsel %vm206, %v570, 0
      %v581 = vsel %vm206, %v571, 0
      %v583 = vsel %vm206, %v572, 0
      %585 = vmatprep.subr.mxu0 %v581
      %586 = vmatpush1.msra.mxu0 %v579
      %587 = vmatprep.subr.mxu0 0.0
      %588 = vmatpush1.msra.mxu0 0.0
      %589 = vmatprep.subr.mxu0 0.0
      %590 = vmatpush1.msra.mxu0 0.0
      %591 = vmatprep.subr.mxu0 0.0
      %592 = vmatpush1.msra.mxu0 0.0
      %593 = vmatprep.subr.mxu0 0.0
      %594 = vmatpush1.msra.mxu0 0.0
      %595 = vmatprep.subr.mxu0 0.0
      %596 = vmatpush1.msra.mxu0 0.0
      %597 = vmatprep.subr.mxu0 0.0
      %598 = vmatpush1.msra.mxu0 0.0
      %599 = vmatprep.subr.mxu0 0.0
      %600 = vmatpush1.msra.mxu0 0.0
      %601 = vmatprep.subr.mxu0 0.0
      %602 = vmatpush1.msra.mxu0 0.0
      %603 = vmatprep.subr.mxu0 0.0
      %604 = vmatpush1.msra.mxu0 0.0
      %605 = vmatprep.subr.mxu0 0.0
      %606 = vmatpush1.msra.mxu0 0.0
      %607 = vmatprep.subr.mxu0 0.0
      %608 = vmatpush1.msra.mxu0 0.0
      %609 = vmatprep.subr.mxu0 0.0
      %610 = vmatpush1.msra.mxu0 0.0
      %611 = vmatprep.subr.mxu0 0.0
      %612 = vmatpush1.msra.mxu0 0.0
      %613 = vmatprep.subr.mxu0 0.0
      %614 = vmatpush1.msra.mxu0 0.0
      %615 = vmatprep.subr.mxu0 0.0
      %616 = vmatpush1.msra.mxu0 0.0
      %617 = vmatprep.subr.mxu0 0.0
      %618 = vmatpush1.msra.mxu0 0.0
      %619 = vmatprep.subr.mxu0 0.0
      %620 = vmatpush1.msra.mxu0 0.0
      %621 = vmatprep.subr.mxu0 0.0
      %622 = vmatpush1.msra.mxu0 0.0
      %623 = vmatprep.subr.mxu0 0.0
      %624 = vmatpush1.msra.mxu0 0.0
      %625 = vmatprep.subr.mxu0 0.0
      %626 = vmatpush1.msra.mxu0 0.0
      %627 = vmatprep.subr.mxu0 0.0
      %628 = vmatpush1.msra.mxu0 0.0
      %629 = vmatprep.subr.mxu0 0.0
      %630 = vmatpush1.msra.mxu0 0.0
      %631 = vmatprep.subr.mxu0 0.0
      %632 = vmatpush1.msra.mxu0 0.0
      %633 = vmatprep.subr.mxu0 0.0
      %634 = vmatpush1.msra.mxu0 0.0
      %635 = vmatprep.subr.mxu0 0.0
      %636 = vmatpush1.msra.mxu0 0.0
      %637 = vmatprep.subr.mxu0 0.0
      %638 = vmatpush1.msra.mxu0 0.0
      %639 = vmatprep.subr.mxu0 0.0
      %640 = vmatpush1.msra.mxu0 0.0
      %641 = vmatprep.subr.mxu0 0.0
      %642 = vmatpush1.msra.mxu0 0.0
      %643 = vmatprep.subr.mxu0 0.0
      %644 = vmatpush1.msra.mxu0 0.0
      %645 = vmatprep.subr.mxu0 0.0
      %646 = vmatpush1.msra.mxu0 0.0
      %647 = vmatprep.subr.mxu0 0.0
      %648 = vmatpush1.msra.mxu0 0.0
      %649 = vmatprep.mubr.f32.mxu0 0.0
      %650 = vmatmul.mubr.f32.gmra.mrb[0].mxu0 %v574
      %v651 = vpop.f32.mrb[0].mxu0
      %v652 = vadd.f32 0.0, %v651
      %v653 = vpop.f32.mrb[0].mxu0
      %v654 = vadd.f32 0.0, %v653
      %655 = vmatprep.mubr.f32.mxu0 0.0
      %656 = vmatmul.mubr.f32.gmra.mrb[0].mxu0 %v577
      %v657 = vpop.f32.mrb[0].mxu0
      %v658 = vadd.f32 0.0, %v657
      %v659 = vpop.f32.mrb[0].mxu0
      %v660 = vadd.f32 0.0, %v659
      %661 = vdwg.mxu0
      %662 = vmatprep.subr.mxu0 0.0
      %663 = vmatpush1.msra.mxu0 %v583
      %664 = vmatprep.subr.mxu0 0.0
      %665 = vmatpush1.msra.mxu0 0.0
      %666 = vmatprep.subr.mxu0 0.0
      %667 = vmatpush1.msra.mxu0 0.0
      %668 = vmatprep.subr.mxu0 0.0
      %669 = vmatpush1.msra.mxu0 0.0
      %670 = vmatprep.subr.mxu0 0.0
      %671 = vmatpush1.msra.mxu0 0.0
      %672 = vmatprep.subr.mxu0 0.0
      %673 = vmatpush1.msra.mxu0 0.0
      %674 = vmatprep.subr.mxu0 0.0
      %675 = vmatpush1.msra.mxu0 0.0
      %676 = vmatprep.subr.mxu0 0.0
      %677 = vmatpush1.msra.mxu0 0.0
      %678 = vmatprep.subr.mxu0 0.0
      %679 = vmatpush1.msra.mxu0 0.0
      %680 = vmatprep.subr.mxu0 0.0
      %681 = vmatpush1.msra.mxu0 0.0
      %682 = vmatprep.subr.mxu0 0.0
      %683 = vmatpush1.msra.mxu0 0.0
      %684 = vmatprep.subr.mxu0 0.0
      %685 = vmatpush1.msra.mxu0 0.0
      %686 = vmatprep.subr.mxu0 0.0
      %687 = vmatpush1.msra.mxu0 0.0
      %688 = vmatprep.subr.mxu0 0.0
      %689 = vmatpush1.msra.mxu0 0.0
      %690 = vmatprep.subr.mxu0 0.0
      %691 = vmatpush1.msra.mxu0 0.0
      %692 = vmatprep.subr.mxu0 0.0
      %693 = vmatpush1.msra.mxu0 0.0
      %694 = vmatprep.subr.mxu0 0.0
      %695 = vmatpush1.msra.mxu0 0.0
      %696 = vmatprep.subr.mxu0 0.0
      %697 = vmatpush1.msra.mxu0 0.0
      %698 = vmatprep.subr.mxu0 0.0
      %699 = vmatpush1.msra.mxu0 0.0
      %700 = vmatprep.subr.mxu0 0.0
      %701 = vmatpush1.msra.mxu0 0.0
      %702 = vmatprep.subr.mxu0 0.0
      %703 = vmatpush1.msra.mxu0 0.0
      %704 = vmatprep.subr.mxu0 0.0
      %705 = vmatpush1.msra.mxu0 0.0
      %706 = vmatprep.subr.mxu0 0.0
      %707 = vmatpush1.msra.mxu0 0.0
      %708 = vmatprep.subr.mxu0 0.0
      %709 = vmatpush1.msra.mxu0 0.0
      %710 = vmatprep.subr.mxu0 0.0
      %711 = vmatpush1.msra.mxu0 0.0
      %712 = vmatprep.subr.mxu0 0.0
      %713 = vmatpush1.msra.mxu0 0.0
      %714 = vmatprep.subr.mxu0 0.0
      %715 = vmatpush1.msra.mxu0 0.0
      %716 = vmatprep.subr.mxu0 0.0
      %717 = vmatpush1.msra.mxu0 0.0
      %718 = vmatprep.subr.mxu0 0.0
      %719 = vmatpush1.msra.mxu0 0.0
      %720 = vmatprep.subr.mxu0 0.0
      %721 = vmatpush1.msra.mxu0 0.0
      %722 = vmatprep.subr.mxu0 0.0
      %723 = vmatpush1.msra.mxu0 0.0
      %724 = vmatprep.subr.mxu0 0.0
      %725 = vmatpush1.msra.mxu0 0.0
      %726 = vmatprep.mubr.f32.mxu0 0.0
      %727 = vmatmul.mubr.f32.gmra.mrb[0].mxu0 %v574
      %v728 = vpop.f32.mrb[0].mxu0
      %v729 = vadd.f32 0.0, %v728
      %v730 = vpop.f32.mrb[0].mxu0
      %731 = vmatprep.mubr.f32.mxu0 0.0
      %732 = vmatmul.mubr.f32.gmra.mrb[0].mxu0 %v577
      %v733 = vpop.f32.mrb[0].mxu0
      %v734 = vadd.f32 0.0, %v733
      %v735 = vpop.f32.mrb[0].mxu0
      %736 = vdwg.mxu0
      %v737 = vadd.f32 %v549, %v652
      %v738 = vadd.f32 %v550, %v654
      %v739 = vadd.f32 %v551, %v729
      %v740 = vadd.f32 %v552, %v658
      %v741 = vadd.f32 %v553, %v660
      %v742 = vadd.f32 %v554, %v734
      %v743 = vld [vmem:[%s165] sm:$0xff]
      %v744 = vld [vmem:[%s165 + $0x8] sm:$0xff]
      %v747 = vcombine.high %v743, %v743
      %v748 = vcombine.high %v744, %v744
      %749 = vrot.lane.b32.xlu0 %v743, 107
      %v750 = vpop.permute.xlu0 %749
      %751 = vrot.lane.b32.xlu0 %v747, 107
      %v752 = vpop.permute.xlu0 %751
      %753 = vrot.lane.b32.xlu0 %v744, 107
      %v754 = vpop.permute.xlu0 %753
      %755 = vrot.lane.b32.xlu0 %v748, 107
      %v756 = vpop.permute.xlu0 %755
      %vm757 = vcmask 875520
      %v758 = vsel %vm757, %v750, %v752
      %v759 = vsel %vm757, %v752, %v754
      %v760 = vsel %vm757, %v754, %v756
      %v762 = vsel %vm199, %v192, 0
      %v765 = vsel %vm199, %v193, 0
      %v767 = vsel %vm206, %v758, 0
      %v769 = vsel %vm206, %v759, 0
      %v771 = vsel %vm206, %v760, 0
      %773 = vmatprep.subr.mxu0 %v769
      %774 = vmatpush1.msra.mxu0 %v767
      %775 = vmatprep.subr.mxu0 0.0
      %776 = vmatpush1.msra.mxu0 0.0
      %777 = vmatprep.subr.mxu0 0.0
      %778 = vmatpush1.msra.mxu0 0.0
      %779 = vmatprep.subr.mxu0 0.0
      %780 = vmatpush1.msra.mxu0 0.0
      %781 = vmatprep.subr.mxu0 0.0
      %782 = vmatpush1.msra.mxu0 0.0
      %783 = vmatprep.subr.mxu0 0.0
      %784 = vmatpush1.msra.mxu0 0.0
      %785 = vmatprep.subr.mxu0 0.0
      %786 = vmatpush1.msra.mxu0 0.0
      %787 = vmatprep.subr.mxu0 0.0
      %788 = vmatpush1.msra.mxu0 0.0
      %789 = vmatprep.subr.mxu0 0.0
      %790 = vmatpush1.msra.mxu0 0.0
      %791 = vmatprep.subr.mxu0 0.0
      %792 = vmatpush1.msra.mxu0 0.0
      %793 = vmatprep.subr.mxu0 0.0
      %794 = vmatpush1.msra.mxu0 0.0
      %795 = vmatprep.subr.mxu0 0.0
      %796 = vmatpush1.msra.mxu0 0.0
      %797 = vmatprep.subr.mxu0 0.0
      %798 = vmatpush1.msra.mxu0 0.0
      %799 = vmatprep.subr.mxu0 0.0
      %800 = vmatpush1.msra.mxu0 0.0
      %801 = vmatprep.subr.mxu0 0.0
      %802 = vmatpush1.msra.mxu0 0.0
      %803 = vmatprep.subr.mxu0 0.0
      %804 = vmatpush1.msra.mxu0 0.0
      %805 = vmatprep.subr.mxu0 0.0
      %806 = vmatpush1.msra.mxu0 0.0
      %807 = vmatprep.subr.mxu0 0.0
      %808 = vmatpush1.msra.mxu0 0.0
      %809 = vmatprep.subr.mxu0 0.0
      %810 = vmatpush1.msra.mxu0 0.0
      %811 = vmatprep.subr.mxu0 0.0
      %812 = vmatpush1.msra.mxu0 0.0
      %813 = vmatprep.subr.mxu0 0.0
      %814 = vmatpush1.msra.mxu0 0.0
      %815 = vmatprep.subr.mxu0 0.0
      %816 = vmatpush1.msra.mxu0 0.0
      %817 = vmatprep.subr.mxu0 0.0
      %818 = vmatpush1.msra.mxu0 0.0
      %819 = vmatprep.subr.mxu0 0.0
      %820 = vmatpush1.msra.mxu0 0.0
      %821 = vmatprep.subr.mxu0 0.0
      %822 = vmatpush1.msra.mxu0 0.0
      %823 = vmatprep.subr.mxu0 0.0
      %824 = vmatpush1.msra.mxu0 0.0
      %825 = vmatprep.subr.mxu0 0.0
      %826 = vmatpush1.msra.mxu0 0.0
      %827 = vmatprep.subr.mxu0 0.0
      %828 = vmatpush1.msra.mxu0 0.0
      %829 = vmatprep.subr.mxu0 0.0
      %830 = vmatpush1.msra.mxu0 0.0
      %831 = vmatprep.subr.mxu0 0.0
      %832 = vmatpush1.msra.mxu0 0.0
      %833 = vmatprep.subr.mxu0 0.0
      %834 = vmatpush1.msra.mxu0 0.0
      %835 = vmatprep.subr.mxu0 0.0
      %836 = vmatpush1.msra.mxu0 0.0
      %837 = vmatprep.mubr.f32.mxu0 0.0
      %838 = vmatmul.mubr.f32.gmra.mrb[0].mxu0 %v762
      %v839 = vpop.f32.mrb[0].mxu0
      %v840 = vadd.f32 0.0, %v839
      %v841 = vpop.f32.mrb[0].mxu0
      %v842 = vadd.f32 0.0, %v841
      %843 = vmatprep.mubr.f32.mxu0 0.0
      %844 = vmatmul.mubr.f32.gmra.mrb[0].mxu0 %v765
      %v845 = vpop.f32.mrb[0].mxu0
      %v846 = vadd.f32 0.0, %v845
      %v847 = vpop.f32.mrb[0].mxu0
      %v848 = vadd.f32 0.0, %v847
      %849 = vdwg.mxu0
      %850 = vmatprep.subr.mxu0 0.0
      %851 = vmatpush1.msra.mxu0 %v771
      %852 = vmatprep.subr.mxu0 0.0
      %853 = vmatpush1.msra.mxu0 0.0
      %854 = vmatprep.subr.mxu0 0.0
      %855 = vmatpush1.msra.mxu0 0.0
      %856 = vmatprep.subr.mxu0 0.0
      %857 = vmatpush1.msra.mxu0 0.0
      %858 = vmatprep.subr.mxu0 0.0
      %859 = vmatpush1.msra.mxu0 0.0
      %860 = vmatprep.subr.mxu0 0.0
      %861 = vmatpush1.msra.mxu0 0.0
      %862 = vmatprep.subr.mxu0 0.0
      %863 = vmatpush1.msra.mxu0 0.0
      %864 = vmatprep.subr.mxu0 0.0
      %865 = vmatpush1.msra.mxu0 0.0
      %866 = vmatprep.subr.mxu0 0.0
      %867 = vmatpush1.msra.mxu0 0.0
      %868 = vmatprep.subr.mxu0 0.0
      %869 = vmatpush1.msra.mxu0 0.0
      %870 = vmatprep.subr.mxu0 0.0
      %871 = vmatpush1.msra.mxu0 0.0
      %872 = vmatprep.subr.mxu0 0.0
      %873 = vmatpush1.msra.mxu0 0.0
      %874 = vmatprep.subr.mxu0 0.0
      %875 = vmatpush1.msra.mxu0 0.0
      %876 = vmatprep.subr.mxu0 0.0
      %877 = vmatpush1.msra.mxu0 0.0
      %878 = vmatprep.subr.mxu0 0.0
      %879 = vmatpush1.msra.mxu0 0.0
      %880 = vmatprep.subr.mxu0 0.0
      %881 = vmatpush1.msra.mxu0 0.0
      %882 = vmatprep.subr.mxu0 0.0
      %883 = vmatpush1.msra.mxu0 0.0
      %884 = vmatprep.subr.mxu0 0.0
      %885 = vmatpush1.msra.mxu0 0.0
      %886 = vmatprep.subr.mxu0 0.0
      %887 = vmatpush1.msra.mxu0 0.0
      %888 = vmatprep.subr.mxu0 0.0
      %889 = vmatpush1.msra.mxu0 0.0
      %890 = vmatprep.subr.mxu0 0.0
      %891 = vmatpush1.msra.mxu0 0.0
      %892 = vmatprep.subr.mxu0 0.0
      %893 = vmatpush1.msra.mxu0 0.0
      %894 = vmatprep.subr.mxu0 0.0
      %895 = vmatpush1.msra.mxu0 0.0
      %896 = vmatprep.subr.mxu0 0.0
      %897 = vmatpush1.msra.mxu0 0.0
      %898 = vmatprep.subr.mxu0 0.0
      %899 = vmatpush1.msra.mxu0 0.0
      %900 = vmatprep.subr.mxu0 0.0
      %901 = vmatpush1.msra.mxu0 0.0
      %902 = vmatprep.subr.mxu0 0.0
      %903 = vmatpush1.msra.mxu0 0.0
      %904 = vmatprep.subr.mxu0 0.0
      %905 = vmatpush1.msra.mxu0 0.0
      %906 = vmatprep.subr.mxu0 0.0
      %907 = vmatpush1.msra.mxu0 0.0
      %908 = vmatprep.subr.mxu0 0.0
      %909 = vmatpush1.msra.mxu0 0.0
      %910 = vmatprep.subr.mxu0 0.0
      %911 = vmatpush1.msra.mxu0 0.0
      %912 = vmatprep.subr.mxu0 0.0
      %913 = vmatpush1.msra.mxu0 0.0
      %914 = vmatprep.mubr.f32.mxu0 0.0
      %915 = vmatmul.mubr.f32.gmra.mrb[0].mxu0 %v762
      %v916 = vpop.f32.mrb[0].mxu0
      %v917 = vadd.f32 0.0, %v916
      %v918 = vpop.f32.mrb[0].mxu0
      %919 = vmatprep.mubr.f32.mxu0 0.0
      %920 = vmatmul.mubr.f32.gmra.mrb[0].mxu0 %v765
      %v921 = vpop.f32.mrb[0].mxu0
      %v922 = vadd.f32 0.0, %v921
      %v923 = vpop.f32.mrb[0].mxu0
      %924 = vdwg.mxu0
      %v925 = vadd.f32 %v737, %v840
      %v926 = vadd.f32 %v738, %v842
      %v927 = vadd.f32 %v739, %v917
      %v928 = vadd.f32 %v740, %v846
      %v929 = vadd.f32 %v741, %v848
      %v930 = vadd.f32 %v742, %v922
      %v931 = vmax.f32 %v925, 0.0
      %v932 = vmax.f32 %v926, 0.0
      %v933 = vmax.f32 %v927, 0.0
      %v934 = vmax.f32 %v928, 0.0
      %v935 = vmax.f32 %v929, 0.0
      %v936 = vmax.f32 %v930, 0.0
      %937 = vst [vmem:[%s170] sm:$0xff] %v931
      %938 = vst [vmem:[%s170 + $0x8] sm:$0xff] %v932
      %vm939 = vcmask 1014784
      %940 = vst.msk [vmem:[%s170 + $0x10] sm:$0xff] %vm939, %v933
      %941 = vst [vmem:[%s170 + $0x18] sm:$0xff] %v934
      %942 = vst [vmem:[%s170 + $0x20] sm:$0xff] %v935
      %943 = vst.msk [vmem:[%s170 + $0x28] sm:$0xff] %vm939, %v936
      %p944 = scmp.lt.s32.totalorder %s14, 1
      %s945 = scalar_select %p944, %s14, 1
      %s946 = smul.addr %s945, 6
      %s947 = smul.addr %s946, 8
      %s948 = scalar_lea.vmem %s3, %s947
      // Predicated region
      $region33: #{cnn_encoder_forward.1} parent=31 // pred_check
        %p949 = pneg %p100
      $region34: #{cnn_encoder_forward.1} parent=31 // pred_check_branch
        %951 = sbr.rel (%p949) target = $region36
      $region35: #{cnn_encoder_forward.1} parent=31 // pred_region
        _
      $region36: #{cnn_encoder_forward.1} parent=31 // pred_fallthru
        _
    $region32: #{cnn_encoder_forward.1} parent=5 // pred_fallthru
      _
    %p952 = scmp.le.s32.totalorder 2, %s9
    // Predicated region
    $region37: #{cnn_encoder_forward.1} parent=5 // pred_check
      %p953 = pneg %p952
    $region38: #{cnn_encoder_forward.1} parent=5 // pred_check_branch
      %955 = sbr.rel (%p953) target = $region40
    $region39: #{cnn_encoder_forward.1} parent=5 // pred_region
      %s956 = ssub.s32 %s9, 2
      // Predicated region
      $region41: #{cnn_encoder_forward.1} parent=39 // pred_check
        %p957 = pneg %p106
      $region42: #{cnn_encoder_forward.1} parent=39 // pred_check_branch
        %959 = sbr.rel (%p957) target = $region44
      $region43: #{cnn_encoder_forward.1} parent=39 // pred_region
        %p960 = scmp.lt.s32.totalorder %s15, 1
        %s961 = scalar_select %p960, %s15, 1
        %s962 = smul.addr %s961, 6
        %s963 = smul.addr %s962, 8
        %s964 = scalar_lea.vmem %s3, %s963
      $region44: #{cnn_encoder_forward.1} parent=39 // pred_fallthru
        _
    $region40: #{cnn_encoder_forward.1} parent=5 // pred_fallthru
      _
  $region6: #{cnn_encoder_forward.1} parent=0 // loop_footer
    %s13 = sadd.s32 1, %s9
  $region7: #{cnn_encoder_forward.1} parent=0 // loop_footer_branch
    %8 = sbr.rel target = $region3
  $region8: #{cnn_encoder_forward.1} parent=0 // loop_exit
    _

</llo_original>
